<compile_context>
chip_gen: v7x
topology: tpu7x:2x2x1
jax: 0.10.0
libtpu: 0.0.40
codegen_flags: <defaults>
</compile_context>

<pallas_src>
import numpy as np
import jax
import jax.numpy as jnp
from jax.experimental import pallas as pl
from jax.experimental.pallas import tpu as pltpu

LANE = 128


def _round_up(v, m):
    return ((v + m - 1) // m) * m


def _pad2(a, rows, cols, dtype):
    a = a.astype(dtype)
    return jnp.pad(a, ((0, rows - a.shape[0]), (0, cols - a.shape[1])))


def _tpu_tiling_config():
    """Per-TPU-generation tile / VMEM choices (see perf review)."""
    kind = ""
    try:
        kind = jax.devices()[0].device_kind.lower()
    except Exception:  # defensive only; defaults below are safe everywhere
        pass
    if ("v5e" in kind) or ("v5 lite" in kind) or ("v5lite" in kind):
        # HBM-bound chip with a 128x128 MXU: keep tn=128, amortize the ~0.35us/step
        # grid overhead with long edge tiles.
        return dict(tn=128, te=512, vmem=64 * 1024 * 1024, split_nodes=False)
    if "v6" in kind:
        # 256x256 MXU, 128 MiB physical VMEM: bigger tiles + bigger scoped-VMEM cap.
        return dict(tn=256, te=512, vmem=80 * 1024 * 1024, split_nodes=False)
    # v7x (and unknown -> most conservative budget): 64 MiB VMEM per TensorCore,
    # 2 TCs -> prefer >=2 node tiles so the "parallel" axis splits across cores.
    return dict(tn=256, te=512, vmem=48 * 1024 * 1024, split_nodes=True)


def edge_proj_kernel(e_ref, w1e_ref, eh_ref):
    # One pass over the edges (hoisted out of the node kernel):
    #   edge_h = edge_attr @ W1e   (bf16 operands, f32 MXU accumulation, bf16 out)
    eh_ref[...] = jnp.dot(e_ref[...], w1e_ref[...],
                          preferred_element_type=jnp.float32).astype(eh_ref.dtype)


def node_block_kernel(x_ref, recv_ref, eh_ref,
                      w1x_ref, b1_ref, w2_ref, b2_ref,
                      out_ref, h_acc_ref):
    i = pl.program_id(0)          # node-tile index (parallel)
    j = pl.program_id(1)          # edge-tile index (reduction, trailing axis)
    tn = x_ref.shape[0]
    te = eh_ref.shape[0]

    # --- init accumulator with the x-path contribution (once per node tile) ---
    @pl.when(j == 0)
    def _():
        h_acc_ref[...] = jnp.dot(x_ref[...], w1x_ref[...],
                                 preferred_element_type=jnp.float32)

    # --- scatter_add folded into the first Linear: per-tile one-hot @ edge_h ---
    # edge_h already carries the edge projection, so every MXU pass emits an
    # h_p-wide (lane-dense) output; the full (N, E) mask is never materialized.
    node_ids = i * tn + jax.lax.broadcasted_iota(jnp.int32, (tn, te), 0)
    recv = recv_ref[...]                                  # (1, te) int32, padded with -1
    onehot = (node_ids == recv).astype(jnp.bfloat16)      # 0/1 -> exact in bf16
    h_acc_ref[...] += jnp.dot(onehot, eh_ref[...],
                              preferred_element_type=jnp.float32)

    # --- finalize: bias + ReLU + second Linear, only on the last edge step ---
    @pl.when(j == pl.num_programs(1) - 1)
    def _():
        h = jnp.maximum(h_acc_ref[...] + b1_ref[...], 0.0)     # f32
        out = jnp.dot(h.astype(jnp.bfloat16), w2_ref[...],
                      preferred_element_type=jnp.float32) + b2_ref[...]
        out_ref[...] = out.astype(out_ref.dtype)


def node_block_forward(x, edge_attr, edge_index, pos, params, *, tn=None, te=None):
    """Pallas-backed NodeBlock.forward. Returns the updated graph as a dict."""
    n, dn = x.shape
    e, de = edge_attr.shape
    w1x, w1e, b1, w2, b2 = params
    h_dim = w1x.shape[1]
    d_out = w2.shape[1]

    cfg = _tpu_tiling_config()
    tn = cfg["tn"] if tn is None else tn
    te = cfg["te"] if te is None else te

    # Clamp tiles to the (padded) problem so small graphs stay single-tile.
    tn = min(tn, _round_up(n, 8))
    te = min(te, _round_up(e, LANE))
    if cfg["split_nodes"] and n > 128 and _round_up(n, tn) == tn:
        # v7x megacore: make sure the "parallel" node axis has >= 2 tiles.
        tn = _round_up((n + 1) // 2, 8)

    dn_p = _round_up(dn, LANE)
    de_p = _round_up(de, LANE)
    h_p = _round_up(h_dim, LANE)
    dout_p = _round_up(d_out, LANE)
    n_p = _round_up(n, tn)
    e_p = _round_up(e, te)

    # Lane/sublane zero-padding; matmul operands pre-cast to bf16 ONCE here.
    x_p = _pad2(x, n_p, dn_p, jnp.bfloat16)
    ea_p = _pad2(edge_attr, e_p, de_p, jnp.bfloat16)
    recv = edge_index[1].astype(jnp.int32)
    recv_p = jnp.full((1, e_p), -1, dtype=jnp.int32).at[0, :e].set(recv)  # -1 never matches

    w1x_p = _pad2(w1x, dn_p, h_p, jnp.bfloat16)
    w1e_p = _pad2(w1e, de_p, h_p, jnp.bfloat16)
    w2_p = _pad2(w2, h_p, dout_p, jnp.bfloat16)
    b1_p = _pad2(b1.reshape(1, -1), 1, h_p, jnp.float32)
    b2_p = _pad2(b2.reshape(1, -1), 1, dout_p, jnp.float32)

    # --- pass 1: hoisted edge projection edge_h = edge_attr @ W1e (bf16 out) ---
    edge_h = pl.pallas_call(
        edge_proj_kernel,
        out_shape=jax.ShapeDtypeStruct((e_p, h_p), jnp.bfloat16),
        grid_spec=pltpu.PrefetchScalarGridSpec(
            num_scalar_prefetch=0,
            grid=(e_p // te,),
            in_specs=[
                pl.BlockSpec((te, de_p), lambda j: (j, 0)),      # edge_attr tile (bf16)
                pl.BlockSpec((de_p, h_p), lambda j: (0, 0)),     # W1e (bf16)
            ],
            out_specs=pl.BlockSpec((te, h_p), lambda j: (j, 0)),
        ),
        compiler_params=pltpu.CompilerParams(
            dimension_semantics=("parallel",),
            vmem_limit_bytes=cfg["vmem"],
        ),
    )(ea_p, w1e_p)

    # --- pass 2: scatter_add (one-hot MXU) + MLP over (node tiles, edge tiles) ---
    grid = (n_p // tn, e_p // te)

    out_p = pl.pallas_call(
        node_block_kernel,
        out_shape=jax.ShapeDtypeStruct((n_p, dout_p), jnp.float32),
        grid_spec=pltpu.PrefetchScalarGridSpec(
            num_scalar_prefetch=0,
            grid=grid,
            in_specs=[
                pl.BlockSpec((tn, dn_p), lambda i, j: (i, 0)),     # x tile (bf16)
                pl.BlockSpec((1, te), lambda i, j: (0, j)),        # receivers tile (int32)
                pl.BlockSpec((te, h_p), lambda i, j: (j, 0)),      # edge_h tile (bf16)
                pl.BlockSpec((dn_p, h_p), lambda i, j: (0, 0)),    # W1x (bf16, constant)
                pl.BlockSpec((1, h_p), lambda i, j: (0, 0)),       # b1 (f32, constant)
                pl.BlockSpec((h_p, dout_p), lambda i, j: (0, 0)),  # W2 (bf16, constant)
                pl.BlockSpec((1, dout_p), lambda i, j: (0, 0)),    # b2 (f32, constant)
            ],
            out_specs=pl.BlockSpec((tn, dout_p), lambda i, j: (i, 0)),
            scratch_shapes=[pltpu.VMEM((tn, h_p), jnp.float32)],   # f32 h accumulator
        ),
        compiler_params=pltpu.CompilerParams(
            dimension_semantics=("parallel", "arbitrary"),
            vmem_limit_bytes=cfg["vmem"],
        ),
    )(x_p, recv_p, edge_h, w1x_p, b1_p, w2_p, b2_p)

    x_new = out_p[:n, :d_out]   # padded rows contain bias/ReLU garbage -> sliced off
    # Graph passthrough (mirrors Data(x=x_, edge_attr=..., edge_index=..., pos=...)).
    return {"x": x_new, "edge_attr": edge_attr, "edge_index": edge_index, "pos": pos}


def reference_forward(x, edge_attr, edge_index, params):
    """Pure-JAX f32 reference mirroring the PyTorch semantics."""
    n_nodes = x.shape[0]
    w1x, w1e, b1, w2, b2 = params
    recv = edge_index[1]
    agg = jax.ops.segment_sum(edge_attr, recv, num_segments=n_nodes)
    node_in = jnp.concatenate([x, agg], axis=-1)
    w1 = jnp.concatenate([w1x, w1e], axis=0)
    h = jnp.maximum(node_in @ w1 + b1.reshape(1, -1), 0.0)
    return h @ w2 + b2.reshape(1, -1)


def _run_case(key, n, e, dn, de, h, dout, rtol, atol):
    k_x, k_e, k_idx, k_pos, k_w1, k_b1, k_w2, k_b2 = jax.random.split(key, 8)
    x = jax.random.normal(k_x, (n, dn), dtype=jnp.float32)
    edge_attr = jax.random.normal(k_e, (e, de), dtype=jnp.float32)
    edge_index = jax.random.randint(k_idx, (2, e), 0, n, dtype=jnp.int32)
    pos = jax.random.normal(k_pos, (n, 2), dtype=jnp.float32)

    w1 = 0.1 * jax.random.normal(k_w1, (dn + de, h), dtype=jnp.float32)
    w1x, w1e = w1[:dn], w1[dn:]
    b1 = 0.01 * jax.random.normal(k_b1, (1, h), dtype=jnp.float32)
    w2 = 0.1 * jax.random.normal(k_w2, (h, dout), dtype=jnp.float32)
    b2 = 0.01 * jax.random.normal(k_b2, (1, dout), dtype=jnp.float32)
    params = (w1x, w1e, b1, w2, b2)

    out_graph = node_block_forward(x, edge_attr, edge_index, pos, params)
    x_new = jax.block_until_ready(out_graph["x"])

    ref = reference_forward(x, edge_attr, edge_index, params)
    np.testing.assert_allclose(np.asarray(x_new), np.asarray(ref), rtol=rtol, atol=atol)


if __name__ == "__main__":
    key = jax.random.PRNGKey(0)
    k1, k2 = jax.random.split(key)

    # Small problem consistent with the module: 8 nodes, 16 edges, 4-d node/edge feats,
    # hidden 32, 4-d output (single-tile grid).  bf16 MXU operands -> loosened tolerance.
    _run_case(k1, n=8, e=16, dn=4, de=4, h=32, dout=4, rtol=5e-2, atol=5e-2)

    # Larger, odd-sized problem exercising the multi-tile grid, the edge-axis
    # accumulator, and the lane/sublane padding paths.
    _run_case(k2, n=200, e=600, dn=7, de=5, h=64, dout=3, rtol=5e-2, atol=5e-2)

    print("KERNEL_OK")
</pallas_src>

<mosaic_0001>
module attributes {stable_mosaic.version = 11 : i64} {
  func.func @edge_proj_kernel(%arg0: i32, %arg1: memref<128x128xbf16, #tpu.memory_space<vmem>>, %arg2: memref<128x128xbf16, #tpu.memory_space<vmem>>, %arg3: memref<128x128xbf16, #tpu.memory_space<vmem>>) attributes {dimension_semantics = [#tpu.dimension_semantics<parallel>], iteration_bounds = array<i64: 1>, scalar_prefetch = 0 : i64, scratch_operands = 0 : i64, tpu.core_type = #tpu.core_type<tc>, window_params = [{transform_indices = @transform_0, window_bounds = array<i64: 128, 128>}, {pipeline_mode = #tpu.pipeline_mode<synchronous>, transform_indices = @transform_1, window_bounds = array<i64: 128, 128>}, {transform_indices = @transform_2, window_bounds = array<i64: 128, 128>}]} {
    %c0 = arith.constant 0 : index
    %c0_0 = arith.constant 0 : index
    %0 = vector.load %arg1[%c0, %c0_0] : memref<128x128xbf16, #tpu.memory_space<vmem>>, vector<128x128xbf16>
    %c0_1 = arith.constant 0 : index
    %c0_2 = arith.constant 0 : index
    %1 = vector.load %arg2[%c0_1, %c0_2] : memref<128x128xbf16, #tpu.memory_space<vmem>>, vector<128x128xbf16>
    %cst = arith.constant dense<0.000000e+00> : vector<128x128xf32>
    %2 = tpu.matmul %0, %1, %cst {dimension_numbers = #tpu.dot_dimension_numbers<[1], [0], [0], [1], [0, 0, 1, 1], [], []>} : vector<128x128xbf16>, vector<128x128xbf16>, vector<128x128xf32> -> vector<128x128xf32>
    %3 = arith.truncf %2 : vector<128x128xf32> to vector<128x128xbf16>
    %c0_3 = arith.constant 0 : index
    %c0_4 = arith.constant 0 : index
    %4 = vector.load %arg3[%c0_3, %c0_4] : memref<128x128xbf16, #tpu.memory_space<vmem>>, vector<128x128xbf16>
    tpu.vector_store %arg3[%c0_3, %c0_4], %3 {strides = array<i32>} : memref<128x128xbf16, #tpu.memory_space<vmem>>, vector<128x128xbf16>,
    return
  }
  func.func @transform_0(%arg0: i32) -> (i32, i32) {
    %c0_i32 = arith.constant 0 : i32
    %c0_i32_0 = arith.constant 0 : i32
    return %arg0, %c0_i32 : i32, i32
  }
  func.func @transform_1(%arg0: i32) -> (i32, i32) {
    %c0_i32 = arith.constant 0 : i32
    %c0_i32_0 = arith.constant 0 : i32
    %c0_i32_1 = arith.constant 0 : i32
    return %c0_i32, %c0_i32_0 : i32, i32
  }
  func.func @transform_2(%arg0: i32) -> (i32, i32) {
    %c0_i32 = arith.constant 0 : i32
    %c0_i32_0 = arith.constant 0 : i32
    return %arg0, %c0_i32 : i32, i32
  }
}

</mosaic_0001>

<llo_original>
// kernel: tpu_custom_call.1
$region0: #{tpu_custom_call.1}
  #allocation0 [shape = 'u32[]', space=smem, size = 0x4, offset = 0x4, fixed_abs, tag = 'smem constant byte address 0x4 - core index']
  #allocation1 [shape = 'u32[144,128]{1,0:T(1,128)}', space=vmem, size = 0x12000, scoped, tag = 'internal scratch']
  %s0 = inlined_call_operand.hbm [shape: bf16[128,128], index: 0, kind: input, shape index: {}]
  %s1 = inlined_call_operand.hbm [shape: bf16[128,128], index: 1, kind: input, shape index: {}]
  %s2 = inlined_call_operand.hbm [shape: bf16[128,128], index: 2, kind: output, shape index: {}]
  %s3 = sld [smem:[#allocation0]]
  $region26: #{tpu_custom_call.1} parent=0
    _
  %s5 = ssub.s32 1, %s3
  %s6 = scalar_select 0, %s5, %s3
  $region1: #{tpu_custom_call.1} parent=0
    #allocation2 [shape = 'u8[32768]{0}', space=vmem, size = 0x8000, scoped, tag = 'input window, operand 0, single buffered']
    #allocation3 [shape = 's32[1]{0}', space=sflag, size = 0x4, scoped, tag = 'scoped memory for tpu_custom_call.1']
    #allocation4 [shape = 's32[1]{0}', space=sflag, size = 0x4, scoped, tag = 'scoped memory for tpu_custom_call.1']
    #allocation5 [shape = 'u8[32768]{0}', space=vmem, size = 0x8000, scoped, tag = 'input window, operand 1, single buffered']
    #allocation6 [shape = 's32[1]{0}', space=sflag, size = 0x4, scoped, tag = 'scoped memory for tpu_custom_call.1']
    #allocation7 [shape = 'u8[32768]{0}', space=vmem, size = 0x8000, scoped, tag = 'output window, operand 0, single buffered']
    %7 = vsyncpa [#allocation3], 0
    %8 = vsyncpa [#allocation6], 0
    %9 = vsyncpa [#allocation4], 0
    // Predicated region
    $region2: #{tpu_custom_call.1} parent=1 // pred_check
      _
    $region3: #{tpu_custom_call.1} parent=1 // pred_check_branch
      %11 = sbr.rel (0) target = $region5
    $region4: #{tpu_custom_call.1} parent=1 // pred_region
      %s13 = ssub.s32 1024, 1024
      %14 = vsyncadd [#allocation3], %s13
      %s15 = sshll.u32 [#allocation2], 4
      %s16 = int_to_ptr.vmem [resolvable:$true] %s15
      %21 = dma.hbm_to_vmem [thread:$0]  %s0, 1024, %s16, [#allocation3], 64, 64, 4
    $region5: #{tpu_custom_call.1} parent=1 // pred_fallthru
      _
    // Predicated region
    $region6: #{tpu_custom_call.1} parent=1 // pred_check
      _
    $region7: #{tpu_custom_call.1} parent=1 // pred_check_branch
      %23 = sbr.rel (0) target = $region9
    $region8: #{tpu_custom_call.1} parent=1 // pred_region
      %s25 = ssub.s32 1024, 1024
      %26 = vsyncadd [#allocation6], %s25
      %s27 = sshll.u32 [#allocation5], 4
      %s28 = int_to_ptr.vmem [resolvable:$true] %s27
      %33 = dma.hbm_to_vmem [thread:$0]  %s1, 1024, %s28, [#allocation6], 64, 64, 4
    $region9: #{tpu_custom_call.1} parent=1 // pred_fallthru
      _
    // Predicated region
    $region10: #{tpu_custom_call.1} parent=1 // pred_check
      _
    $region11: #{tpu_custom_call.1} parent=1 // pred_check_branch
      %35 = sbr.rel (0) target = $region13
    $region12: #{tpu_custom_call.1} parent=1 // pred_region
      %36 = dma.done [#allocation3], 1024
    $region13: #{tpu_custom_call.1} parent=1 // pred_fallthru
      _
    // Predicated region
    $region14: #{tpu_custom_call.1} parent=1 // pred_check
      _
    $region15: #{tpu_custom_call.1} parent=1 // pred_check_branch
      %38 = sbr.rel (0) target = $region17
    $region16: #{tpu_custom_call.1} parent=1 // pred_region
      %39 = dma.done [#allocation6], 1024
    $region17: #{tpu_custom_call.1} parent=1 // pred_fallthru
      _
    %v41 = vld [vmem:[#allocation2] sm:$0xf]
    %v42 = vld [vmem:[#allocation2 + $0x4] sm:$0xf]
    %v43 = vld [vmem:[#allocation2 + $0x8] sm:$0xf]
    %v44 = vld [vmem:[#allocation2 + $0xc] sm:$0xf]
    %v45 = vld [vmem:[#allocation2 + $0x10] sm:$0xf]
    %v46 = vld [vmem:[#allocation2 + $0x14] sm:$0xf]
    %v47 = vld [vmem:[#allocation2 + $0x18] sm:$0xf]
    %v48 = vld [vmem:[#allocation2 + $0x1c] sm:$0xf]
    %v49 = vld [vmem:[#allocation2 + $0x20] sm:$0xf]
    %v50 = vld [vmem:[#allocation2 + $0x24] sm:$0xf]
    %v51 = vld [vmem:[#allocation2 + $0x28] sm:$0xf]
    %v52 = vld [vmem:[#allocation2 + $0x2c] sm:$0xf]
    %v53 = vld [vmem:[#allocation2 + $0x30] sm:$0xf]
    %v54 = vld [vmem:[#allocation2 + $0x34] sm:$0xf]
    %v55 = vld [vmem:[#allocation2 + $0x38] sm:$0xf]
    %v56 = vld [vmem:[#allocation2 + $0x3c] sm:$0xf]
    %v57 = vld [vmem:[#allocation5] sm:$0xf]
    %v58 = vld [vmem:[#allocation5 + $0x4] sm:$0xf]
    %v59 = vld [vmem:[#allocation5 + $0x8] sm:$0xf]
    %v60 = vld [vmem:[#allocation5 + $0xc] sm:$0xf]
    %v61 = vld [vmem:[#allocation5 + $0x10] sm:$0xf]
    %v62 = vld [vmem:[#allocation5 + $0x14] sm:$0xf]
    %v63 = vld [vmem:[#allocation5 + $0x18] sm:$0xf]
    %v64 = vld [vmem:[#allocation5 + $0x1c] sm:$0xf]
    %v65 = vld [vmem:[#allocation5 + $0x20] sm:$0xf]
    %v66 = vld [vmem:[#allocation5 + $0x24] sm:$0xf]
    %v67 = vld [vmem:[#allocation5 + $0x28] sm:$0xf]
    %v68 = vld [vmem:[#allocation5 + $0x2c] sm:$0xf]
    %v69 = vld [vmem:[#allocation5 + $0x30] sm:$0xf]
    %v70 = vld [vmem:[#allocation5 + $0x34] sm:$0xf]
    %v71 = vld [vmem:[#allocation5 + $0x38] sm:$0xf]
    %v72 = vld [vmem:[#allocation5 + $0x3c] sm:$0xf]
    %v89 = vunpack.c.l.b16 %v41
    %v90 = vunpack.c.l.b16 %v42
    %v91 = vunpack.c.l.b16 %v43
    %v92 = vunpack.c.l.b16 %v44
    %v93 = vunpack.c.l.b16 %v45
    %v94 = vunpack.c.l.b16 %v46
    %v95 = vunpack.c.l.b16 %v47
    %v96 = vunpack.c.l.b16 %v48
    %v97 = vunpack.c.l.b16 %v49
    %v98 = vunpack.c.l.b16 %v50
    %v99 = vunpack.c.l.b16 %v51
    %v100 = vunpack.c.l.b16 %v52
    %v101 = vunpack.c.l.b16 %v53
    %v102 = vunpack.c.l.b16 %v54
    %v103 = vunpack.c.l.b16 %v55
    %v104 = vunpack.c.l.b16 %v56
    %v105 = vpack.c.b16 %v90, %v89
    %v106 = vpack.c.b16 %v92, %v91
    %v107 = vpack.c.b16 %v94, %v93
    %v108 = vpack.c.b16 %v96, %v95
    %v109 = vpack.c.b16 %v98, %v97
    %v110 = vpack.c.b16 %v100, %v99
    %v111 = vpack.c.b16 %v102, %v101
    %v112 = vpack.c.b16 %v104, %v103
    %v137 = vunpack.c.l.b16 %v57
    %v138 = vunpack.c.l.b16 %v58
    %v139 = vunpack.c.l.b16 %v59
    %v140 = vunpack.c.l.b16 %v60
    %v141 = vunpack.c.l.b16 %v61
    %v142 = vunpack.c.l.b16 %v62
    %v143 = vunpack.c.l.b16 %v63
    %v144 = vunpack.c.l.b16 %v64
    %v145 = vunpack.c.l.b16 %v65
    %v146 = vunpack.c.l.b16 %v66
    %v147 = vunpack.c.l.b16 %v67
    %v148 = vunpack.c.l.b16 %v68
    %v149 = vunpack.c.l.b16 %v69
    %v150 = vunpack.c.l.b16 %v70
    %v151 = vunpack.c.l.b16 %v71
    %v152 = vunpack.c.l.b16 %v72
    %v153 = vpack.c.b16 %v138, %v137
    %v154 = vpack.c.b16 %v140, %v139
    %v155 = vpack.c.b16 %v142, %v141
    %v156 = vpack.c.b16 %v144, %v143
    %v157 = vpack.c.b16 %v146, %v145
    %v158 = vpack.c.b16 %v148, %v147
    %v159 = vpack.c.b16 %v150, %v149
    %v160 = vpack.c.b16 %v152, %v151
    %169 = vmatprep.subr.bf16.mxu0 0
    %170 = vmatpush1.bf16.msra.mxu0 %v153
    %171 = vmatprep.subr.bf16.mxu0 0
    %172 = vmatpush1.bf16.msra.mxu0 %v154
    %173 = vmatprep.subr.bf16.mxu0 0
    %174 = vmatpush1.bf16.msra.mxu0 %v155
    %175 = vmatprep.subr.bf16.mxu0 0
    %176 = vmatpush1.bf16.msra.mxu0 %v156
    %177 = vmatprep.subr.bf16.mxu0 0
    %178 = vmatpush1.bf16.msra.mxu0 %v157
    %179 = vmatprep.subr.bf16.mxu0 0
    %180 = vmatpush1.bf16.msra.mxu0 %v158
    %181 = vmatprep.subr.bf16.mxu0 0
    %182 = vmatpush1.bf16.msra.mxu0 %v159
    %183 = vmatprep.subr.bf16.mxu0 0
    %184 = vmatpush1.bf16.msra.mxu0 %v160
    %185 = vmatprep.subr.bf16.mxu0 0
    %186 = vmatpush1.bf16.msra.mxu0 0
    %187 = vmatprep.subr.bf16.mxu0 0
    %188 = vmatpush1.bf16.msra.mxu0 0
    %189 = vmatprep.subr.bf16.mxu0 0
    %190 = vmatpush1.bf16.msra.mxu0 0
    %191 = vmatprep.subr.bf16.mxu0 0
    %192 = vmatpush1.bf16.msra.mxu0 0
    %193 = vmatprep.subr.bf16.mxu0 0
    %194 = vmatpush1.bf16.msra.mxu0 0
    %195 = vmatprep.subr.bf16.mxu0 0
    %196 = vmatpush1.bf16.msra.mxu0 0
    %197 = vmatprep.subr.bf16.mxu0 0
    %198 = vmatpush1.bf16.msra.mxu0 0
    %199 = vmatprep.subr.bf16.mxu0 0
    %200 = vmatpush1.bf16.msra.mxu0 0
    %201 = vmatprep.mubr.bf16.mxu0 0
    %202 = vmatmul.mubr.bf16.gmra.mrb[0].mxu0 %v105
    %v203 = vpop.f32.mrb[0].mxu0
    %v204 = vadd.f32 0.0, %v203
    %v205 = vpop.f32.mrb[0].mxu0
    %v206 = vpop.f32.mrb[0].mxu0
    %v207 = vadd.f32 0.0, %v206
    %v208 = vpop.f32.mrb[0].mxu0
    %209 = vmatprep.mubr.bf16.mxu0 0
    %210 = vmatmul.mubr.bf16.gmra.mrb[0].mxu0 %v106
    %v211 = vpop.f32.mrb[0].mxu0
    %v212 = vadd.f32 0.0, %v211
    %v213 = vpop.f32.mrb[0].mxu0
    %v214 = vpop.f32.mrb[0].mxu0
    %v215 = vadd.f32 0.0, %v214
    %v216 = vpop.f32.mrb[0].mxu0
    %217 = vmatprep.mubr.bf16.mxu0 0
    %218 = vmatmul.mubr.bf16.gmra.mrb[0].mxu0 %v107
    %v219 = vpop.f32.mrb[0].mxu0
    %v220 = vadd.f32 0.0, %v219
    %v221 = vpop.f32.mrb[0].mxu0
    %v222 = vpop.f32.mrb[0].mxu0
    %v223 = vadd.f32 0.0, %v222
    %v224 = vpop.f32.mrb[0].mxu0
    %225 = vmatprep.mubr.bf16.mxu0 0
    %226 = vmatmul.mubr.bf16.gmra.mrb[0].mxu0 %v108
    %v227 = vpop.f32.mrb[0].mxu0
    %v228 = vadd.f32 0.0, %v227
    %v229 = vpop.f32.mrb[0].mxu0
    %v230 = vpop.f32.mrb[0].mxu0
    %v231 = vadd.f32 0.0, %v230
    %v232 = vpop.f32.mrb[0].mxu0
    %233 = vmatprep.mubr.bf16.mxu0 0
    %234 = vmatmul.mubr.bf16.gmra.mrb[0].mxu0 %v109
    %v235 = vpop.f32.mrb[0].mxu0
    %v236 = vadd.f32 0.0, %v235
    %v237 = vpop.f32.mrb[0].mxu0
    %v238 = vpop.f32.mrb[0].mxu0
    %v239 = vadd.f32 0.0, %v238
    %v240 = vpop.f32.mrb[0].mxu0
    %241 = vmatprep.mubr.bf16.mxu0 0
    %242 = vmatmul.mubr.bf16.gmra.mrb[0].mxu0 %v110
    %v243 = vpop.f32.mrb[0].mxu0
    %v244 = vadd.f32 0.0, %v243
    %v245 = vpop.f32.mrb[0].mxu0
    %v246 = vpop.f32.mrb[0].mxu0
    %v247 = vadd.f32 0.0, %v246
    %v248 = vpop.f32.mrb[0].mxu0
    %249 = vmatprep.mubr.bf16.mxu0 0
    %250 = vmatmul.mubr.bf16.gmra.mrb[0].mxu0 %v111
    %v251 = vpop.f32.mrb[0].mxu0
    %v252 = vadd.f32 0.0, %v251
    %v253 = vpop.f32.mrb[0].mxu0
    %v254 = vpop.f32.mrb[0].mxu0
    %v255 = vadd.f32 0.0, %v254
    %v256 = vpop.f32.mrb[0].mxu0
    %257 = vmatprep.mubr.bf16.mxu0 0
    %258 = vmatmul.mubr.bf16.gmra.mrb[0].mxu0 %v112
    %v259 = vpop.f32.mrb[0].mxu0
    %v260 = vadd.f32 0.0, %v259
    %v261 = vpop.f32.mrb[0].mxu0
    %v262 = vpop.f32.mrb[0].mxu0
    %v263 = vadd.f32 0.0, %v262
    %v264 = vpop.f32.mrb[0].mxu0
    %265 = vdwg.mxu0
    %v266 = vpack.c.bf16 %v207, %v204
    %v267 = vpack.c.bf16 %v215, %v212
    %v268 = vpack.c.bf16 %v223, %v220
    %v269 = vpack.c.bf16 %v231, %v228
    %v270 = vpack.c.bf16 %v239, %v236
    %v271 = vpack.c.bf16 %v247, %v244
    %v272 = vpack.c.bf16 %v255, %v252
    %v273 = vpack.c.bf16 %v263, %v260
    %v282 = vunpack.c.l.b16 %v266
    %v283 = vunpack.c.h.b16 %v266
    %v284 = vunpack.c.l.b16 %v267
    %v285 = vunpack.c.h.b16 %v267
    %v286 = vunpack.c.l.b16 %v268
    %v287 = vunpack.c.h.b16 %v268
    %v288 = vunpack.c.l.b16 %v269
    %v289 = vunpack.c.h.b16 %v269
    %v290 = vunpack.c.l.b16 %v270
    %v291 = vunpack.c.h.b16 %v270
    %v292 = vunpack.c.l.b16 %v271
    %v293 = vunpack.c.h.b16 %v271
    %v294 = vunpack.c.l.b16 %v272
    %v295 = vunpack.c.h.b16 %v272
    %v296 = vunpack.c.l.b16 %v273
    %v297 = vunpack.c.h.b16 %v273
    %v298 = vpack.c.b16 %v282, %v282
    %v299 = vpack.c.b16 %v283, %v283
    %v300 = vpack.c.b16 %v284, %v284
    %v301 = vpack.c.b16 %v285, %v285
    %v302 = vpack.c.b16 %v286, %v286
    %v303 = vpack.c.b16 %v287, %v287
    %v304 = vpack.c.b16 %v288, %v288
    %v305 = vpack.c.b16 %v289, %v289
    %v306 = vpack.c.b16 %v290, %v290
    %v307 = vpack.c.b16 %v291, %v291
    %v308 = vpack.c.b16 %v292, %v292
    %v309 = vpack.c.b16 %v293, %v293
    %v310 = vpack.c.b16 %v294, %v294
    %v311 = vpack.c.b16 %v295, %v295
    %v312 = vpack.c.b16 %v296, %v296
    %v313 = vpack.c.b16 %v297, %v297
    %330 = vst [vmem:[#allocation7] sm:$0xf] %v298
    %331 = vst [vmem:[#allocation7 + $0x4] sm:$0xf] %v299
    %332 = vst [vmem:[#allocation7 + $0x8] sm:$0xf] %v300
    %333 = vst [vmem:[#allocation7 + $0xc] sm:$0xf] %v301
    %334 = vst [vmem:[#allocation7 + $0x10] sm:$0xf] %v302
    %335 = vst [vmem:[#allocation7 + $0x14] sm:$0xf] %v303
    %336 = vst [vmem:[#allocation7 + $0x18] sm:$0xf] %v304
    %337 = vst [vmem:[#allocation7 + $0x1c] sm:$0xf] %v305
    %338 = vst [vmem:[#allocation7 + $0x20] sm:$0xf] %v306
    %339 = vst [vmem:[#allocation7 + $0x24] sm:$0xf] %v307
    %340 = vst [vmem:[#allocation7 + $0x28] sm:$0xf] %v308
    %341 = vst [vmem:[#allocation7 + $0x2c] sm:$0xf] %v309
    %342 = vst [vmem:[#allocation7 + $0x30] sm:$0xf] %v310
    %343 = vst [vmem:[#allocation7 + $0x34] sm:$0xf] %v311
    %344 = vst [vmem:[#allocation7 + $0x38] sm:$0xf] %v312
    %345 = vst [vmem:[#allocation7 + $0x3c] sm:$0xf] %v313
    // Predicated region
    $region18: #{tpu_custom_call.1} parent=1 // pred_check
      _
    $region19: #{tpu_custom_call.1} parent=1 // pred_check_branch
      %347 = sbr.rel (0) target = $region21
    $region20: #{tpu_custom_call.1} parent=1 // pred_region
      %s349 = ssub.s32 1024, 1024
      %350 = vsyncadd [#allocation4], %s349
      %s351 = sshll.u32 [#allocation7], 4
      %s352 = int_to_ptr.vmem [resolvable:$true] %s351
      %357 = dma.vmem_to_hbm [thread:$0]  %s352, 1024, %s2, [#allocation4], 64, 64, 4
    $region21: #{tpu_custom_call.1} parent=1 // pred_fallthru
      _
    // Predicated region
    $region22: #{tpu_custom_call.1} parent=1 // pred_check
      _
    $region23: #{tpu_custom_call.1} parent=1 // pred_check_branch
      %359 = sbr.rel (0) target = $region25
    $region24: #{tpu_custom_call.1} parent=1 // pred_region
      %360 = dma.done [#allocation4], 1024
    $region25: #{tpu_custom_call.1} parent=1 // pred_fallthru
      _
    %361 = vsyncpa [#allocation3], 1
    %362 = vsyncpa [#allocation6], 1
    %363 = vsyncpa [#allocation4], 1

</llo_original>
